<compile_context>
chip_gen: v6e
topology: v6e:2x2x1
jax: 0.10.0
libtpu: 0.0.40
codegen_flags: <defaults>
</compile_context>

<pallas_src>
import jax
import jax.numpy as jnp
from jax.experimental import pallas as pl
from jax.experimental.pallas import tpu as pltpu


def _round_up(x, m):
    return ((x + m - 1) // m) * m


# ----------------------------- Pallas kernel ------------------------------- #

def _matmul_bias_kernel(a_ref, b_ref, bias_ref, o_ref, acc_ref):
    """o[i,j] = sum_k a[i,k] @ b[k,j] + bias[j]   (f32 accumulation)."""
    k = pl.program_id(2)

    @pl.when(k == 0)
    def _():
        acc_ref[...] = jnp.zeros_like(acc_ref)

    acc_ref[...] += jnp.dot(
        a_ref[...], b_ref[...], preferred_element_type=jnp.float32
    )

    @pl.when(k == pl.num_programs(2) - 1)
    def _():
        o_ref[...] = (acc_ref[...] + bias_ref[...]).astype(o_ref.dtype)


def pallas_matmul_bias(a, b, bias=None, *, tm=256, tn=256, tk=256):
    """Tiled (a @ b + bias). Inputs are zero-padded so every tile is
    MXU/layout aligned (last dim %128, second-to-last %8) and the output last
    dim is lane-dense."""
    M, K = a.shape
    Kb, N = b.shape
    assert K == Kb

    # Clamp default tiles to the (aligned) problem size: toy shapes become a
    # single full block, large shapes get MXU-native 256 tiles.
    tm = min(tm, _round_up(M, 8))
    tn = min(tn, _round_up(N, 128))
    tk = min(tk, _round_up(K, 128))
    Mp, Kp, Np = _round_up(M, tm), _round_up(K, tk), _round_up(N, tn)

    a_p = jnp.zeros((Mp, Kp), a.dtype).at[:M, :K].set(a)
    b_p = jnp.zeros((Kp, Np), b.dtype).at[:K, :N].set(b)
    bias_p = jnp.zeros((1, Np), jnp.float32)
    if bias is not None:
        bias_p = bias_p.at[:, :N].set(bias.reshape(1, N).astype(jnp.float32))

    grid = (Mp // tm, Np // tn, Kp // tk)

    out = pl.pallas_call(
        _matmul_bias_kernel,
        out_shape=jax.ShapeDtypeStruct((Mp, Np), a.dtype),
        grid_spec=pltpu.PrefetchScalarGridSpec(
            num_scalar_prefetch=0,
            grid=grid,
            in_specs=[
                pl.BlockSpec((tm, tk), lambda i, j, k: (i, k)),   # A row/K tile
                pl.BlockSpec((tk, tn), lambda i, j, k: (k, j)),   # B K/col tile
                pl.BlockSpec((1, tn), lambda i, j, k: (0, j)),    # bias col tile
            ],
            out_specs=pl.BlockSpec((tm, tn), lambda i, j, k: (i, j)),
            scratch_shapes=[pltpu.VMEM((tm, tn), jnp.float32)],
        ),
        compiler_params=pltpu.CompilerParams(
            # Row / col tiles are independent -> parallel (shards across both
            # TensorCores on v7x); the contraction axis is last and sequential.
            dimension_semantics=("parallel", "parallel", "arbitrary"),
            # ~2 MiB actually used at 256 tiles; explicit cap fits v5e/v6e/v7x.
            vmem_limit_bytes=32 * 1024 * 1024,
        ),
    )(a_p, b_p, bias_p)

    return out[:M, :N]


# ------------------------------ JAX glue ----------------------------------- #

def gcn_norm_dense(edge_index, num_nodes):
    """Dense normalized adjacency: D^{-1/2}(A + I)D^{-1/2}.

    Matches PyG gcn_norm (add_remaining_self_loops, unit edge weights):
      * duplicate (non-self-loop) edges are summed (scatter-add semantics),
      * every node's self-loop weight ends up exactly 1.
    edge_index: int32 [2, E], row 0 = source j, row 1 = target i (msg j -> i).
    """
    src, dst = edge_index[0], edge_index[1]
    adj = jnp.zeros((num_nodes, num_nodes), jnp.float32)
    adj = adj.at[dst, src].add(1.0)                # sum duplicate edges
    diag = jnp.arange(num_nodes)
    adj = adj.at[diag, diag].set(1.0)              # remaining self-loops -> 1
    deg = adj.sum(axis=1)
    d_inv_sqrt = jnp.where(deg > 0.0, 1.0 / jnp.sqrt(deg), 0.0)
    return d_inv_sqrt[:, None] * adj * d_inv_sqrt[None, :]


def encoder_forward(x, edge_index, params):
    """Encoder.forward: sequentially apply GCNConv layers (no activation,
    exactly as the original module)."""
    n = x.shape[0]
    a_hat = gcn_norm_dense(edge_index, n)
    # TODO(synk): for large sparse graphs, replace the dense A_hat matmul with
    # a scalar-prefetch CSR-gather kernel; dense A_hat is O(N^2) HBM traffic.
    for (w, b) in params:
        h = pallas_matmul_bias(x, w.T)             # H = X @ W^T
        x = pallas_matmul_bias(a_hat, h, b)        # OUT = A_hat @ H + b
    # TODO(synk): Encoder.scale() is defined but unused in forward; not ported.
    return x


def init_encoder_params(layer_dims, key):
    """Deterministic GCNConv params: weight (out, in) glorot-like, bias zeros."""
    params = []
    for i in range(len(layer_dims) - 1):
        key, sub = jax.random.split(key)
        fan_in, fan_out = layer_dims[i], layer_dims[i + 1]
        lim = jnp.sqrt(6.0 / (fan_in + fan_out))
        w = jax.random.uniform(
            sub, (fan_out, fan_in), jnp.float32, minval=-lim, maxval=lim
        )
        b = jnp.zeros((fan_out,), jnp.float32)
        params.append((w, b))
    return params


# --------------------------------- main ------------------------------------ #

if __name__ == "__main__":
    key = jax.random.PRNGKey(0)

    # Small synthetic graph: N nodes, F input features, C output channels.
    N, F, C, E = 64, 32, 16, 256
    layer_dims = [F, C]            # one GCNConv layer, as in the Encoder

    k_x, k_src, k_dst, k_p = jax.random.split(key, 4)
    x = jax.random.normal(k_x, (N, F), jnp.float32)
    src = jax.random.randint(k_src, (E,), 0, N, jnp.int32)
    dst = jax.random.randint(k_dst, (E,), 0, N, jnp.int32)
    edge_index = jnp.stack([src, dst], axis=0)      # [2, E]

    params = init_encoder_params(layer_dims, k_p)

    out = encoder_forward(x, edge_index, params)
    out = jax.block_until_ready(out)

    # Pure-JAX reference for sanity.
    a_hat = gcn_norm_dense(edge_index, N)
    ref = x
    for (w, b) in params:
        ref = a_hat @ (ref @ w.T) + b
    assert out.shape == (N, C)
    assert jnp.allclose(out, ref, atol=1e-4, rtol=1e-4)

    print("KERNEL_OK")
</pallas_src>

<mosaic_0001>
module attributes {stable_mosaic.version = 11 : i64} {
  func.func @_matmul_bias_kernel(%arg0: i32, %arg1: i32, %arg2: i32, %arg3: memref<64x128xf32, #tpu.memory_space<vmem>>, %arg4: memref<128x128xf32, #tpu.memory_space<vmem>>, %arg5: memref<1x128xf32, #tpu.memory_space<vmem>>, %arg6: memref<64x128xf32, #tpu.memory_space<vmem>>, %arg7: memref<64x128xf32, #tpu.memory_space<vmem>>) attributes {dimension_semantics = [#tpu.dimension_semantics<parallel>, #tpu.dimension_semantics<parallel>, #tpu.dimension_semantics<arbitrary>], iteration_bounds = array<i64: 1, 1, 1>, scalar_prefetch = 0 : i64, scratch_operands = 1 : i64, tpu.core_type = #tpu.core_type<tc>, window_params = [{transform_indices = @transform_0, window_bounds = array<i64: 64, 128>}, {transform_indices = @transform_1, window_bounds = array<i64: 128, 128>}, {transform_indices = @transform_2, window_bounds = array<i64: 1, 128>}, {transform_indices = @transform_3, window_bounds = array<i64: 64, 128>}]} {
    %c0_i32 = arith.constant 0 : i32
    %0 = arith.cmpi eq, %arg2, %c0_i32 : i32
    %1 = arith.extui %0 : i1 to i32
    %c0_i32_0 = arith.constant 0 : i32
    %2 = arith.cmpi ne, %1, %c0_i32_0 : i32
    scf.if %2 {
      %cst_10 = arith.constant 0.000000e+00 : f32
      %12 = vector.broadcast %cst_10 : f32 to vector<64x128xf32>
      %c0_11 = arith.constant 0 : index
      %c0_12 = arith.constant 0 : index
      %13 = vector.load %arg7[%c0_11, %c0_12] : memref<64x128xf32, #tpu.memory_space<vmem>>, vector<64x128xf32>
      tpu.vector_store %arg7[%c0_11, %c0_12], %12 {strides = array<i32>} : memref<64x128xf32, #tpu.memory_space<vmem>>, vector<64x128xf32>,
    } else {
    }
    %c0 = arith.constant 0 : index
    %c0_1 = arith.constant 0 : index
    %3 = vector.load %arg7[%c0, %c0_1] : memref<64x128xf32, #tpu.memory_space<vmem>>, vector<64x128xf32>
    %c0_2 = arith.constant 0 : index
    %c0_3 = arith.constant 0 : index
    %4 = vector.load %arg3[%c0_2, %c0_3] : memref<64x128xf32, #tpu.memory_space<vmem>>, vector<64x128xf32>
    %c0_4 = arith.constant 0 : index
    %c0_5 = arith.constant 0 : index
    %5 = vector.load %arg4[%c0_4, %c0_5] : memref<128x128xf32, #tpu.memory_space<vmem>>, vector<128x128xf32>
    %cst = arith.constant dense<0.000000e+00> : vector<64x128xf32>
    %6 = tpu.matmul %4, %5, %cst {dimension_numbers = #tpu.dot_dimension_numbers<[1], [0], [0], [1], [0, 0, 1, 1], [], []>} : vector<64x128xf32>, vector<128x128xf32>, vector<64x128xf32> -> vector<64x128xf32>
    %7 = arith.addf %3, %6 : vector<64x128xf32>
    %c0_6 = arith.constant 0 : index
    %c0_7 = arith.constant 0 : index
    %8 = vector.load %arg7[%c0_6, %c0_7] : memref<64x128xf32, #tpu.memory_space<vmem>>, vector<64x128xf32>
    tpu.vector_store %arg7[%c0_6, %c0_7], %7 {strides = array<i32>} : memref<64x128xf32, #tpu.memory_space<vmem>>, vector<64x128xf32>,
    %c0_i32_8 = arith.constant 0 : i32
    %9 = arith.cmpi eq, %arg2, %c0_i32_8 : i32
    %10 = arith.extui %9 : i1 to i32
    %c0_i32_9 = arith.constant 0 : i32
    %11 = arith.cmpi ne, %10, %c0_i32_9 : i32
    scf.if %11 {
      %c0_10 = arith.constant 0 : index
      %c0_11 = arith.constant 0 : index
      %12 = vector.load %arg7[%c0_10, %c0_11] : memref<64x128xf32, #tpu.memory_space<vmem>>, vector<64x128xf32>
      %c0_12 = arith.constant 0 : index
      %c0_13 = arith.constant 0 : index
      %13 = vector.load %arg5[%c0_12, %c0_13] : memref<1x128xf32, #tpu.memory_space<vmem>>, vector<1x128xf32>
      %14 = vector.broadcast %13 : vector<1x128xf32> to vector<64x128xf32>
      %15 = arith.addf %12, %14 : vector<64x128xf32>
      %c0_14 = arith.constant 0 : index
      %c0_15 = arith.constant 0 : index
      %16 = vector.load %arg6[%c0_14, %c0_15] : memref<64x128xf32, #tpu.memory_space<vmem>>, vector<64x128xf32>
      tpu.vector_store %arg6[%c0_14, %c0_15], %15 {strides = array<i32>} : memref<64x128xf32, #tpu.memory_space<vmem>>, vector<64x128xf32>,
    } else {
    }
    return
  }
  func.func @transform_0(%arg0: i32, %arg1: i32, %arg2: i32) -> (i32, i32) {
    %c0_i32 = arith.constant 0 : i32
    return %arg0, %arg2 : i32, i32
  }
  func.func @transform_1(%arg0: i32, %arg1: i32, %arg2: i32) -> (i32, i32) {
    %c0_i32 = arith.constant 0 : i32
    return %arg2, %arg1 : i32, i32
  }
  func.func @transform_2(%arg0: i32, %arg1: i32, %arg2: i32) -> (i32, i32) {
    %c0_i32 = arith.constant 0 : i32
    %c0_i32_0 = arith.constant 0 : i32
    return %c0_i32, %arg1 : i32, i32
  }
  func.func @transform_3(%arg0: i32, %arg1: i32, %arg2: i32) -> (i32, i32) {
    %c0_i32 = arith.constant 0 : i32
    return %arg0, %arg1 : i32, i32
  }
}

</mosaic_0001>

<llo_original>
// kernel: tpu_custom_call.1
$region0: #{tpu_custom_call.1}
  #allocation0 [shape = 'u32[]', space=smem, size = 0x4, offset = 0x4, fixed_abs, tag = 'smem constant byte address 0x4 - core index']
  #allocation1 [shape = 'u32[144,128]{1,0:T(1,128)}', space=vmem, size = 0x12000, scoped, tag = 'internal scratch']
  #allocation2 [shape = 'f32[64,128]{1,0:T(8,128)}', space=vmem, size = 0x8000, scoped, tag = 'scratch operand']
  %s0 = inlined_call_operand.hbm [shape: f32[64,128], index: 0, kind: input, shape index: {}]
  %s1 = inlined_call_operand.hbm [shape: f32[128,128], index: 1, kind: input, shape index: {}]
  %s2 = inlined_call_operand.vmem [shape: f32[1,128], index: 2, kind: input, shape index: {}]
  %s3 = inlined_call_operand.hbm [shape: f32[64,128], index: 3, kind: output, shape index: {}]
  %s4 = sld [smem:[#allocation0]]
  $region38: #{tpu_custom_call.1} parent=0
    _
  %s6 = ssub.s32 1, %s4
  %s7 = scalar_select 0, %s6, %s4
  $region1: #{tpu_custom_call.1} parent=0
    #allocation3 [shape = 'u8[32768]{0}', space=vmem, size = 0x8000, scoped, tag = 'input window, operand 0, single buffered']
    #allocation4 [shape = 's32[1]{0}', space=sflag, size = 0x4, scoped, tag = 'scoped memory for tpu_custom_call.1']
    #allocation5 [shape = 's32[1]{0}', space=sflag, size = 0x4, scoped, tag = 'scoped memory for tpu_custom_call.1']
    #allocation6 [shape = 'u8[65536]{0}', space=vmem, size = 0x10000, scoped, tag = 'input window, operand 1, single buffered']
    #allocation7 [shape = 's32[1]{0}', space=sflag, size = 0x4, scoped, tag = 'scoped memory for tpu_custom_call.1']
    #allocation8 [shape = 'u8[32768]{0}', space=vmem, size = 0x8000, scoped, tag = 'output window, operand 0, single buffered']
    %8 = vsyncpa [#allocation4], 0
    %9 = vsyncpa [#allocation7], 0
    %10 = vsyncpa [#allocation5], 0
    // Predicated region
    $region2: #{tpu_custom_call.1} parent=1 // pred_check
      _
    $region3: #{tpu_custom_call.1} parent=1 // pred_check_branch
      %12 = sbr.rel (0) target = $region5
    $region4: #{tpu_custom_call.1} parent=1 // pred_region
      %s14 = ssub.s32 1024, 1024
      %15 = vsyncadd [#allocation4], %s14
      %s16 = sshll.u32 [#allocation3], 4
      %s17 = int_to_ptr.vmem [resolvable:$true] %s16
      %22 = dma.hbm_to_vmem [thread:$0]  %s0, 1024, %s17, [#allocation4], 128, 128, 8
    $region5: #{tpu_custom_call.1} parent=1 // pred_fallthru
      _
    // Predicated region
    $region6: #{tpu_custom_call.1} parent=1 // pred_check
      _
    $region7: #{tpu_custom_call.1} parent=1 // pred_check_branch
      %24 = sbr.rel (0) target = $region9
    $region8: #{tpu_custom_call.1} parent=1 // pred_region
      %s26 = ssub.s32 2048, 2048
      %27 = vsyncadd [#allocation7], %s26
      %s28 = sshll.u32 [#allocation6], 4
      %s29 = int_to_ptr.vmem [resolvable:$true] %s28
      %34 = dma.hbm_to_vmem [thread:$0]  %s1, 2048, %s29, [#allocation7], 128, 128, 8
    $region9: #{tpu_custom_call.1} parent=1 // pred_fallthru
      _
    // Predicated region
    $region10: #{tpu_custom_call.1} parent=1 // pred_check
      _
    $region11: #{tpu_custom_call.1} parent=1 // pred_check_branch
      %36 = sbr.rel (0) target = $region13
    $region12: #{tpu_custom_call.1} parent=1 // pred_region
      _
    $region13: #{tpu_custom_call.1} parent=1 // pred_fallthru
      _
    // Predicated region
    $region14: #{tpu_custom_call.1} parent=1 // pred_check
      _
    $region15: #{tpu_custom_call.1} parent=1 // pred_check_branch
      %38 = sbr.rel (0) target = $region17
    $region16: #{tpu_custom_call.1} parent=1 // pred_region
      %39 = dma.done [#allocation4], 1024
    $region17: #{tpu_custom_call.1} parent=1 // pred_fallthru
      _
    // Predicated region
    $region18: #{tpu_custom_call.1} parent=1 // pred_check
      _
    $region19: #{tpu_custom_call.1} parent=1 // pred_check_branch
      %41 = sbr.rel (0) target = $region21
    $region20: #{tpu_custom_call.1} parent=1 // pred_region
      %42 = dma.done [#allocation7], 2048
    $region21: #{tpu_custom_call.1} parent=1 // pred_fallthru
      _
    %p43 = scmp.eq.s32.totalorder 0, 0
    // Predicated region
    $region22: #{tpu_custom_call.1} parent=1 // pred_check
      %p44 = pneg %p43
    $region23: #{tpu_custom_call.1} parent=1 // pred_check_branch
      %46 = sbr.rel (%p44) target = $region25
    $region24: #{tpu_custom_call.1} parent=1 // pred_region
      %47 = vst [vmem:[#allocation2] sm:$0xff] 0.0
      %48 = vst [vmem:[#allocation2 + $0x8] sm:$0xff] 0.0
      %49 = vst [vmem:[#allocation2 + $0x10] sm:$0xff] 0.0
      %50 = vst [vmem:[#allocation2 + $0x18] sm:$0xff] 0.0
      %51 = vst [vmem:[#allocation2 + $0x20] sm:$0xff] 0.0
      %52 = vst [vmem:[#allocation2 + $0x28] sm:$0xff] 0.0
      %53 = vst [vmem:[#allocation2 + $0x30] sm:$0xff] 0.0
      %54 = vst [vmem:[#allocation2 + $0x38] sm:$0xff] 0.0
    $region25: #{tpu_custom_call.1} parent=1 // pred_fallthru
      _
    %v55 = vld [vmem:[#allocation2] sm:$0xff]
    %v56 = vld [vmem:[#allocation2 + $0x8] sm:$0xff]
    %v57 = vld [vmem:[#allocation2 + $0x10] sm:$0xff]
    %v58 = vld [vmem:[#allocation2 + $0x18] sm:$0xff]
    %v59 = vld [vmem:[#allocation2 + $0x20] sm:$0xff]
    %v60 = vld [vmem:[#allocation2 + $0x28] sm:$0xff]
    %v61 = vld [vmem:[#allocation2 + $0x30] sm:$0xff]
    %v62 = vld [vmem:[#allocation2 + $0x38] sm:$0xff]
    %v63 = vld [vmem:[#allocation3] sm:$0xff]
    %v64 = vld [vmem:[#allocation3 + $0x8] sm:$0xff]
    %v65 = vld [vmem:[#allocation3 + $0x10] sm:$0xff]
    %v66 = vld [vmem:[#allocation3 + $0x18] sm:$0xff]
    %v67 = vld [vmem:[#allocation3 + $0x20] sm:$0xff]
    %v68 = vld [vmem:[#allocation3 + $0x28] sm:$0xff]
    %v69 = vld [vmem:[#allocation3 + $0x30] sm:$0xff]
    %v70 = vld [vmem:[#allocation3 + $0x38] sm:$0xff]
    %v71 = vld [vmem:[#allocation6] sm:$0xff]
    %v72 = vld [vmem:[#allocation6 + $0x8] sm:$0xff]
    %v73 = vld [vmem:[#allocation6 + $0x10] sm:$0xff]
    %v74 = vld [vmem:[#allocation6 + $0x18] sm:$0xff]
    %v75 = vld [vmem:[#allocation6 + $0x20] sm:$0xff]
    %v76 = vld [vmem:[#allocation6 + $0x28] sm:$0xff]
    %v77 = vld [vmem:[#allocation6 + $0x30] sm:$0xff]
    %v78 = vld [vmem:[#allocation6 + $0x38] sm:$0xff]
    %v79 = vld [vmem:[#allocation6 + $0x40] sm:$0xff]
    %v80 = vld [vmem:[#allocation6 + $0x48] sm:$0xff]
    %v81 = vld [vmem:[#allocation6 + $0x50] sm:$0xff]
    %v82 = vld [vmem:[#allocation6 + $0x58] sm:$0xff]
    %v83 = vld [vmem:[#allocation6 + $0x60] sm:$0xff]
    %v84 = vld [vmem:[#allocation6 + $0x68] sm:$0xff]
    %v85 = vld [vmem:[#allocation6 + $0x70] sm:$0xff]
    %v86 = vld [vmem:[#allocation6 + $0x78] sm:$0xff]
    %87 = vmatprep.subr.mxu0 0.0
    %88 = vmatpush1.msra.mxu0 %v86
    %89 = vmatprep.subr.mxu0 0.0
    %90 = vmatpush1.msra.mxu0 %v85
    %91 = vmatprep.subr.mxu0 0.0
    %92 = vmatpush1.msra.mxu0 %v84
    %93 = vmatprep.subr.mxu0 0.0
    %94 = vmatpush1.msra.mxu0 %v83
    %95 = vmatprep.subr.mxu0 0.0
    %96 = vmatpush1.msra.mxu0 %v82
    %97 = vmatprep.subr.mxu0 0.0
    %98 = vmatpush1.msra.mxu0 %v81
    %99 = vmatprep.subr.mxu0 0.0
    %100 = vmatpush1.msra.mxu0 %v80
    %101 = vmatprep.subr.mxu0 0.0
    %102 = vmatpush1.msra.mxu0 %v79
    %103 = vmatprep.subr.mxu0 0.0
    %104 = vmatpush1.msra.mxu0 %v78
    %105 = vmatprep.subr.mxu0 0.0
    %106 = vmatpush1.msra.mxu0 %v77
    %107 = vmatprep.subr.mxu0 0.0
    %108 = vmatpush1.msra.mxu0 %v76
    %109 = vmatprep.subr.mxu0 0.0
    %110 = vmatpush1.msra.mxu0 %v75
    %111 = vmatprep.subr.mxu0 0.0
    %112 = vmatpush1.msra.mxu0 %v74
    %113 = vmatprep.subr.mxu0 0.0
    %114 = vmatpush1.msra.mxu0 %v73
    %115 = vmatprep.subr.mxu0 0.0
    %116 = vmatpush1.msra.mxu0 %v72
    %117 = vmatprep.subr.mxu0 0.0
    %118 = vmatpush1.msra.mxu0 %v71
    %119 = vmatprep.subr.mxu0 0.0
    %120 = vmatpush2.msra.mxu0 0.0
    %121 = vmatprep.subr.mxu0 0.0
    %122 = vmatpush2.msra.mxu0 0.0
    %123 = vmatprep.subr.mxu0 0.0
    %124 = vmatpush2.msra.mxu0 0.0
    %125 = vmatprep.subr.mxu0 0.0
    %126 = vmatpush2.msra.mxu0 0.0
    %127 = vmatprep.subr.mxu0 0.0
    %128 = vmatpush2.msra.mxu0 0.0
    %129 = vmatprep.subr.mxu0 0.0
    %130 = vmatpush2.msra.mxu0 0.0
    %131 = vmatprep.subr.mxu0 0.0
    %132 = vmatpush2.msra.mxu0 0.0
    %133 = vmatprep.subr.mxu0 0.0
    %134 = vmatpush2.msra.mxu0 0.0
    %135 = vmatprep.subr.mxu0 0.0
    %136 = vmatpush2.msra.mxu0 0.0
    %137 = vmatprep.subr.mxu0 0.0
    %138 = vmatpush2.msra.mxu0 0.0
    %139 = vmatprep.subr.mxu0 0.0
    %140 = vmatpush2.msra.mxu0 0.0
    %141 = vmatprep.subr.mxu0 0.0
    %142 = vmatpush2.msra.mxu0 0.0
    %143 = vmatprep.subr.mxu0 0.0
    %144 = vmatpush2.msra.mxu0 0.0
    %145 = vmatprep.subr.mxu0 0.0
    %146 = vmatpush2.msra.mxu0 0.0
    %147 = vmatprep.subr.mxu0 0.0
    %148 = vmatpush2.msra.mxu0 0.0
    %149 = vmatprep.subr.mxu0 0.0
    %150 = vmatpush2.msra.mxu0 0.0
    %151 = vmatprep.mubr.f32.mxu0 0.0
    %152 = vmatmul.mubr.f32.gmra.mxu0 %v63
    %v153 = vpop.f32.mrf.mxu0
    %v154 = vadd.f32 0.0, %v153
    %v155 = vpop.f32.mrf.mxu0
    %156 = vmatprep.mubr.f32.mxu0 0.0
    %157 = vmatmul.mubr.f32.gmra.mxu0 %v64
    %v158 = vpop.f32.mrf.mxu0
    %v159 = vadd.f32 0.0, %v158
    %v160 = vpop.f32.mrf.mxu0
    %161 = vmatprep.mubr.f32.mxu0 0.0
    %162 = vmatmul.mubr.f32.gmra.mxu0 %v65
    %v163 = vpop.f32.mrf.mxu0
    %v164 = vadd.f32 0.0, %v163
    %v165 = vpop.f32.mrf.mxu0
    %166 = vmatprep.mubr.f32.mxu0 0.0
    %167 = vmatmul.mubr.f32.gmra.mxu0 %v66
    %v168 = vpop.f32.mrf.mxu0
    %v169 = vadd.f32 0.0, %v168
    %v170 = vpop.f32.mrf.mxu0
    %171 = vmatprep.mubr.f32.mxu0 0.0
    %172 = vmatmul.mubr.f32.gmra.mxu0 %v67
    %v173 = vpop.f32.mrf.mxu0
    %v174 = vadd.f32 0.0, %v173
    %v175 = vpop.f32.mrf.mxu0
    %176 = vmatprep.mubr.f32.mxu0 0.0
    %177 = vmatmul.mubr.f32.gmra.mxu0 %v68
    %v178 = vpop.f32.mrf.mxu0
    %v179 = vadd.f32 0.0, %v178
    %v180 = vpop.f32.mrf.mxu0
    %181 = vmatprep.mubr.f32.mxu0 0.0
    %182 = vmatmul.mubr.f32.gmra.mxu0 %v69
    %v183 = vpop.f32.mrf.mxu0
    %v184 = vadd.f32 0.0, %v183
    %v185 = vpop.f32.mrf.mxu0
    %186 = vmatprep.mubr.f32.mxu0 0.0
    %187 = vmatmul.mubr.f32.gmra.mxu0 %v70
    %v188 = vpop.f32.mrf.mxu0
    %v189 = vadd.f32 0.0, %v188
    %v190 = vpop.f32.mrf.mxu0
    %191 = vdwg.mxu0
    %v192 = vadd.f32 %v55, %v154
    %v193 = vadd.f32 %v56, %v159
    %v194 = vadd.f32 %v57, %v164
    %v195 = vadd.f32 %v58, %v169
    %v196 = vadd.f32 %v59, %v174
    %v197 = vadd.f32 %v60, %v179
    %v198 = vadd.f32 %v61, %v184
    %v199 = vadd.f32 %v62, %v189
    %200 = vst [vmem:[#allocation2] sm:$0xff] %v192
    %201 = vst [vmem:[#allocation2 + $0x8] sm:$0xff] %v193
    %202 = vst [vmem:[#allocation2 + $0x10] sm:$0xff] %v194
    %203 = vst [vmem:[#allocation2 + $0x18] sm:$0xff] %v195
    %204 = vst [vmem:[#allocation2 + $0x20] sm:$0xff] %v196
    %205 = vst [vmem:[#allocation2 + $0x28] sm:$0xff] %v197
    %206 = vst [vmem:[#allocation2 + $0x30] sm:$0xff] %v198
    %207 = vst [vmem:[#allocation2 + $0x38] sm:$0xff] %v199
    // Predicated region
    $region26: #{tpu_custom_call.1} parent=1 // pred_check
      %p208 = pneg %p43
    $region27: #{tpu_custom_call.1} parent=1 // pred_check_branch
      %210 = sbr.rel (%p208) target = $region29
    $region28: #{tpu_custom_call.1} parent=1 // pred_region
      %v211 = vld [vmem:[#allocation2] sm:$0xff]
      %v212 = vld [vmem:[#allocation2 + $0x8] sm:$0xff]
      %v213 = vld [vmem:[#allocation2 + $0x10] sm:$0xff]
      %v214 = vld [vmem:[#allocation2 + $0x18] sm:$0xff]
      %v215 = vld [vmem:[#allocation2 + $0x20] sm:$0xff]
      %v216 = vld [vmem:[#allocation2 + $0x28] sm:$0xff]
      %v217 = vld [vmem:[#allocation2 + $0x30] sm:$0xff]
      %v218 = vld [vmem:[#allocation2 + $0x38] sm:$0xff]
      %v219 = vld [vmem:[%s2] sm:$0x1]
      %v221 = vlaneseq
      %v222 = vshrl.u32 %v221, 7
      %v223 = vsub.s32 0, %v222
      %v224 = vrot.slane %v219, %v223
      %v226 = vadd.f32 %v211, %v224
      %v227 = vadd.f32 %v212, %v224
      %v228 = vadd.f32 %v213, %v224
      %v229 = vadd.f32 %v214, %v224
      %v230 = vadd.f32 %v215, %v224
      %v231 = vadd.f32 %v216, %v224
      %v232 = vadd.f32 %v217, %v224
      %v233 = vadd.f32 %v218, %v224
      %234 = vst [vmem:[#allocation8] sm:$0xff] %v226
      %235 = vst [vmem:[#allocation8 + $0x8] sm:$0xff] %v227
      %236 = vst [vmem:[#allocation8 + $0x10] sm:$0xff] %v228
      %237 = vst [vmem:[#allocation8 + $0x18] sm:$0xff] %v229
      %238 = vst [vmem:[#allocation8 + $0x20] sm:$0xff] %v230
      %239 = vst [vmem:[#allocation8 + $0x28] sm:$0xff] %v231
      %240 = vst [vmem:[#allocation8 + $0x30] sm:$0xff] %v232
      %241 = vst [vmem:[#allocation8 + $0x38] sm:$0xff] %v233
    $region29: #{tpu_custom_call.1} parent=1 // pred_fallthru
      _
    // Predicated region
    $region30: #{tpu_custom_call.1} parent=1 // pred_check
      _
    $region31: #{tpu_custom_call.1} parent=1 // pred_check_branch
      %243 = sbr.rel (0) target = $region33
    $region32: #{tpu_custom_call.1} parent=1 // pred_region
      %s245 = ssub.s32 1024, 1024
      %246 = vsyncadd [#allocation5], %s245
      %s247 = sshll.u32 [#allocation8], 4
      %s248 = int_to_ptr.vmem [resolvable:$true] %s247
      %253 = dma.vmem_to_hbm [thread:$0]  %s248, 1024, %s3, [#allocation5], 128, 128, 8
    $region33: #{tpu_custom_call.1} parent=1 // pred_fallthru
      _
    // Predicated region
    $region34: #{tpu_custom_call.1} parent=1 // pred_check
      _
    $region35: #{tpu_custom_call.1} parent=1 // pred_check_branch
      %255 = sbr.rel (0) target = $region37
    $region36: #{tpu_custom_call.1} parent=1 // pred_region
      %256 = dma.done [#allocation5], 1024
    $region37: #{tpu_custom_call.1} parent=1 // pred_fallthru
      _
    %257 = vsyncpa [#allocation4], 1
    %258 = vsyncpa [#allocation7], 1
    %259 = vsyncpa [#allocation5], 1

</llo_original>
